<compile_context>
chip_gen: v5e
topology: v5e:2x2
jax: 0.10.0
libtpu: 0.0.40
codegen_flags: <defaults>
</compile_context>

<pallas_src>
import jax
import jax.numpy as jnp
from jax.experimental import pallas as pl
from jax.experimental.pallas import tpu as pltpu


def _round_up(x, m):
    return ((x + m - 1) // m) * m


def _mlp_kernel(x_ref, w1_ref, b1_ref, w2_ref, b2_ref, w3_ref, b3_ref, out_ref):
    # Layer 1: (TB, D)bf16 @ (D, H)bf16 -> f32 acc, + bias, ReLU
    h1 = jnp.dot(x_ref[...], w1_ref[...], preferred_element_type=jnp.float32)
    h1 = jnp.maximum(h1 + b1_ref[...], 0.0).astype(jnp.bfloat16)
    # Layer 2: (TB, H)bf16 @ (H, H)bf16 -> f32 acc, + bias, ReLU
    h2 = jnp.dot(h1, w2_ref[...], preferred_element_type=jnp.float32)
    h2 = jnp.maximum(h2 + b2_ref[...], 0.0).astype(jnp.bfloat16)
    # Head: (TB, H)bf16 @ (H, 128)bf16 -> f32 acc, + bias (lane-dense store)
    out = jnp.dot(h2, w3_ref[...], preferred_element_type=jnp.float32)
    out_ref[...] = out + b3_ref[...]


def continual_model_forward(x_nchw, params):
    """Forward pass of ContinualModel (== backbone MLP forward).

    x_nchw: (B, C, H, W) float32; flattened row-major like torch .view(B, -1).
    params: dict with w1 (D,Hd), b1 (1,Hd), w2 (Hd,Hd), b2 (1,Hd),
            w3 (Hd,Cls), b3 (1,Cls)  -- all float32 (cast internally).
    """
    B = x_nchw.shape[0]
    x = x_nchw.reshape(B, -1)
    D = x.shape[1]

    w1 = params["w1"].astype(jnp.bfloat16)
    w2 = params["w2"].astype(jnp.bfloat16)
    b1 = params["b1"].astype(jnp.float32)
    b2 = params["b2"].astype(jnp.float32)
    Hd = w1.shape[1]
    n_cls = params["w3"].shape[1]

    # Lane-dense classifier head: zero-pad N to a multiple of 128.
    n_pad = _round_up(max(n_cls, 128), 128)
    w3 = jnp.pad(params["w3"], ((0, 0), (0, n_pad - n_cls))).astype(jnp.bfloat16)
    b3 = jnp.pad(params["b3"], ((0, 0), (0, n_pad - n_cls))).astype(jnp.float32)

    # Batch: pad to a sublane multiple and tile the grid over it.
    if B <= 128:
        tile_b = _round_up(max(B, 8), 8)
        b_pad = tile_b
    else:
        tile_b = 128
        b_pad = _round_up(B, tile_b)
    x = jnp.pad(x, ((0, b_pad - B), (0, 0))).astype(jnp.bfloat16)

    grid = (b_pad // tile_b,)

    # Weights/biases: same block for every grid step -> DMA'd once, resident.
    def _resident(shape):
        return pl.BlockSpec(shape, lambda i: (0, 0))

    flops = 2 * b_pad * (D * Hd + Hd * Hd + Hd * n_pad)
    bytes_accessed = (
        x.size * 2                                   # bf16 activations in
        + (w1.size + w2.size + w3.size) * 2          # bf16 weights
        + (b1.size + b2.size + b3.size) * 4          # f32 biases
        + b_pad * n_pad * 4                          # f32 logits out
    )

    out = pl.pallas_call(
        _mlp_kernel,
        out_shape=jax.ShapeDtypeStruct((b_pad, n_pad), jnp.float32),
        grid=grid,
        in_specs=[
            pl.BlockSpec((tile_b, D), lambda i: (i, 0)),   # x tile
            _resident((D, Hd)),                            # w1
            _resident((1, Hd)),                            # b1
            _resident((Hd, Hd)),                           # w2
            _resident((1, Hd)),                            # b2
            _resident((Hd, n_pad)),                        # w3 (padded)
            _resident((1, n_pad)),                         # b3 (padded)
        ],
        out_specs=pl.BlockSpec((tile_b, n_pad), lambda i: (i, 0)),
        compiler_params=pltpu.CompilerParams(
            dimension_semantics=("parallel",),
        ),
        cost_estimate=pl.CostEstimate(
            flops=flops, transcendentals=0, bytes_accessed=bytes_accessed
        ),
    )(x, w1, b1, w2, b2, w3, b3)

    return out[:B, :n_cls]


def init_params(key, in_features, hidden, n_classes):
    """Deterministic synthetic init (kaiming-uniform-like scaling)."""
    k1, k2, k3 = jax.random.split(key, 3)

    def lin(k, fan_in, fan_out):
        bound = 1.0 / jnp.sqrt(jnp.float32(fan_in))
        kw, kb = jax.random.split(k)
        w = jax.random.uniform(kw, (fan_in, fan_out), jnp.float32, -bound, bound)
        b = jax.random.uniform(kb, (1, fan_out), jnp.float32, -bound, bound)
        return w, b

    w1, b1 = lin(k1, in_features, hidden)
    w2, b2 = lin(k2, hidden, hidden)
    w3, b3 = lin(k3, hidden, n_classes)
    return {"w1": w1, "b1": b1, "w2": w2, "b2": b2, "w3": w3, "b3": b3}


if __name__ == "__main__":
    # Small shapes consistent with the forward: NCHW image batch.
    B, C, H, W = 2, 4, 16, 16          # x: (2, 4, 16, 16)
    HIDDEN = 128
    N_CLASSES = 10
    IN_FEATURES = C * H * W            # 1024 after flatten

    key = jax.random.PRNGKey(0)
    kx, kp = jax.random.split(key)
    x = jax.random.normal(kx, (B, C, H, W), jnp.float32)
    params = init_params(kp, IN_FEATURES, HIDDEN, N_CLASSES)

    logits = continual_model_forward(x, params)
    jax.block_until_ready(logits)
    assert logits.shape == (B, N_CLASSES)

    # Pure-JAX reference with identical bf16-weight / f32-accumulate semantics.
    xf = x.reshape(B, -1).astype(jnp.bfloat16)
    w1b = params["w1"].astype(jnp.bfloat16)
    w2b = params["w2"].astype(jnp.bfloat16)
    w3b = params["w3"].astype(jnp.bfloat16)
    h1 = jnp.maximum(
        jnp.dot(xf, w1b, preferred_element_type=jnp.float32) + params["b1"], 0.0
    ).astype(jnp.bfloat16)
    h2 = jnp.maximum(
        jnp.dot(h1, w2b, preferred_element_type=jnp.float32) + params["b2"], 0.0
    ).astype(jnp.bfloat16)
    ref_bf16 = jnp.dot(h2, w3b, preferred_element_type=jnp.float32) + params["b3"]
    assert jnp.allclose(logits, ref_bf16, atol=2e-2, rtol=2e-2)

    # Loose sanity check against the full-f32 math (expected bf16 quant error).
    h1f = jnp.maximum(x.reshape(B, -1) @ params["w1"] + params["b1"], 0.0)
    h2f = jnp.maximum(h1f @ params["w2"] + params["b2"], 0.0)
    ref_f32 = h2f @ params["w3"] + params["b3"]
    assert jnp.allclose(logits, ref_f32, atol=5e-2, rtol=5e-2)

    # TODO(synk): observe() is an abstract training hook (pass) in the source
    # module; there is no forward compute to translate for it.
    print("KERNEL_OK")
</pallas_src>

<mosaic_0001>
module attributes {stable_mosaic.version = 11 : i64} {
  func.func @_mlp_kernel(%arg0: i32, %arg1: memref<8x1024xbf16, #tpu.memory_space<vmem>>, %arg2: memref<1024x128xbf16, #tpu.memory_space<vmem>>, %arg3: memref<1x128xf32, #tpu.memory_space<vmem>>, %arg4: memref<128x128xbf16, #tpu.memory_space<vmem>>, %arg5: memref<1x128xf32, #tpu.memory_space<vmem>>, %arg6: memref<128x128xbf16, #tpu.memory_space<vmem>>, %arg7: memref<1x128xf32, #tpu.memory_space<vmem>>, %arg8: memref<8x128xf32, #tpu.memory_space<vmem>>) attributes {dimension_semantics = [#tpu.dimension_semantics<parallel>], iteration_bounds = array<i64: 1>, scalar_prefetch = 0 : i64, scratch_operands = 0 : i64, tpu.core_type = #tpu.core_type<tc>, window_params = [{transform_indices = @transform_0, window_bounds = array<i64: 8, 1024>}, {pipeline_mode = #tpu.pipeline_mode<synchronous>, transform_indices = @transform_1, window_bounds = array<i64: 1024, 128>}, {pipeline_mode = #tpu.pipeline_mode<synchronous>, transform_indices = @transform_2, window_bounds = array<i64: 1, 128>}, {pipeline_mode = #tpu.pipeline_mode<synchronous>, transform_indices = @transform_3, window_bounds = array<i64: 128, 128>}, {pipeline_mode = #tpu.pipeline_mode<synchronous>, transform_indices = @transform_4, window_bounds = array<i64: 1, 128>}, {pipeline_mode = #tpu.pipeline_mode<synchronous>, transform_indices = @transform_5, window_bounds = array<i64: 128, 128>}, {pipeline_mode = #tpu.pipeline_mode<synchronous>, transform_indices = @transform_6, window_bounds = array<i64: 1, 128>}, {transform_indices = @transform_7, window_bounds = array<i64: 8, 128>}]} {
    %c0 = arith.constant 0 : index
    %c0_0 = arith.constant 0 : index
    %0 = vector.load %arg1[%c0, %c0_0] : memref<8x1024xbf16, #tpu.memory_space<vmem>>, vector<8x1024xbf16>
    %c0_1 = arith.constant 0 : index
    %c0_2 = arith.constant 0 : index
    %1 = vector.load %arg2[%c0_1, %c0_2] : memref<1024x128xbf16, #tpu.memory_space<vmem>>, vector<1024x128xbf16>
    %cst = arith.constant dense<0.000000e+00> : vector<8x128xf32>
    %2 = tpu.matmul %0, %1, %cst {dimension_numbers = #tpu.dot_dimension_numbers<[1], [0], [0], [1], [0, 0, 1, 1], [], []>} : vector<8x1024xbf16>, vector<1024x128xbf16>, vector<8x128xf32> -> vector<8x128xf32>
    %c0_3 = arith.constant 0 : index
    %c0_4 = arith.constant 0 : index
    %3 = vector.load %arg3[%c0_3, %c0_4] : memref<1x128xf32, #tpu.memory_space<vmem>>, vector<1x128xf32>
    %4 = vector.broadcast %3 : vector<1x128xf32> to vector<8x128xf32>
    %5 = arith.addf %2, %4 : vector<8x128xf32>
    %cst_5 = arith.constant 0.000000e+00 : f32
    %6 = vector.broadcast %cst_5 : f32 to vector<8x128xf32>
    %7 = arith.maximumf %5, %6 : vector<8x128xf32>
    %8 = arith.truncf %7 : vector<8x128xf32> to vector<8x128xbf16>
    %c0_6 = arith.constant 0 : index
    %c0_7 = arith.constant 0 : index
    %9 = vector.load %arg4[%c0_6, %c0_7] : memref<128x128xbf16, #tpu.memory_space<vmem>>, vector<128x128xbf16>
    %cst_8 = arith.constant dense<0.000000e+00> : vector<8x128xf32>
    %10 = tpu.matmul %8, %9, %cst_8 {dimension_numbers = #tpu.dot_dimension_numbers<[1], [0], [0], [1], [0, 0, 1, 1], [], []>} : vector<8x128xbf16>, vector<128x128xbf16>, vector<8x128xf32> -> vector<8x128xf32>
    %c0_9 = arith.constant 0 : index
    %c0_10 = arith.constant 0 : index
    %11 = vector.load %arg5[%c0_9, %c0_10] : memref<1x128xf32, #tpu.memory_space<vmem>>, vector<1x128xf32>
    %12 = vector.broadcast %11 : vector<1x128xf32> to vector<8x128xf32>
    %13 = arith.addf %10, %12 : vector<8x128xf32>
    %cst_11 = arith.constant 0.000000e+00 : f32
    %14 = vector.broadcast %cst_11 : f32 to vector<8x128xf32>
    %15 = arith.maximumf %13, %14 : vector<8x128xf32>
    %16 = arith.truncf %15 : vector<8x128xf32> to vector<8x128xbf16>
    %c0_12 = arith.constant 0 : index
    %c0_13 = arith.constant 0 : index
    %17 = vector.load %arg6[%c0_12, %c0_13] : memref<128x128xbf16, #tpu.memory_space<vmem>>, vector<128x128xbf16>
    %cst_14 = arith.constant dense<0.000000e+00> : vector<8x128xf32>
    %18 = tpu.matmul %16, %17, %cst_14 {dimension_numbers = #tpu.dot_dimension_numbers<[1], [0], [0], [1], [0, 0, 1, 1], [], []>} : vector<8x128xbf16>, vector<128x128xbf16>, vector<8x128xf32> -> vector<8x128xf32>
    %c0_15 = arith.constant 0 : index
    %c0_16 = arith.constant 0 : index
    %19 = vector.load %arg7[%c0_15, %c0_16] : memref<1x128xf32, #tpu.memory_space<vmem>>, vector<1x128xf32>
    %20 = vector.broadcast %19 : vector<1x128xf32> to vector<8x128xf32>
    %21 = arith.addf %18, %20 : vector<8x128xf32>
    %c0_17 = arith.constant 0 : index
    %c0_18 = arith.constant 0 : index
    %22 = vector.load %arg8[%c0_17, %c0_18] : memref<8x128xf32, #tpu.memory_space<vmem>>, vector<8x128xf32>
    tpu.vector_store %arg8[%c0_17, %c0_18], %21 {strides = array<i32>} : memref<8x128xf32, #tpu.memory_space<vmem>>, vector<8x128xf32>,
    return
  }
  func.func @transform_0(%arg0: i32) -> (i32, i32) {
    %c0_i32 = arith.constant 0 : i32
    %c0_i32_0 = arith.constant 0 : i32
    return %arg0, %c0_i32 : i32, i32
  }
  func.func @transform_1(%arg0: i32) -> (i32, i32) {
    %c0_i32 = arith.constant 0 : i32
    %c0_i32_0 = arith.constant 0 : i32
    %c0_i32_1 = arith.constant 0 : i32
    return %c0_i32, %c0_i32_0 : i32, i32
  }
  func.func @transform_2(%arg0: i32) -> (i32, i32) {
    %c0_i32 = arith.constant 0 : i32
    %c0_i32_0 = arith.constant 0 : i32
    %c0_i32_1 = arith.constant 0 : i32
    return %c0_i32, %c0_i32_0 : i32, i32
  }
  func.func @transform_3(%arg0: i32) -> (i32, i32) {
    %c0_i32 = arith.constant 0 : i32
    %c0_i32_0 = arith.constant 0 : i32
    %c0_i32_1 = arith.constant 0 : i32
    return %c0_i32, %c0_i32_0 : i32, i32
  }
  func.func @transform_4(%arg0: i32) -> (i32, i32) {
    %c0_i32 = arith.constant 0 : i32
    %c0_i32_0 = arith.constant 0 : i32
    %c0_i32_1 = arith.constant 0 : i32
    return %c0_i32, %c0_i32_0 : i32, i32
  }
  func.func @transform_5(%arg0: i32) -> (i32, i32) {
    %c0_i32 = arith.constant 0 : i32
    %c0_i32_0 = arith.constant 0 : i32
    %c0_i32_1 = arith.constant 0 : i32
    return %c0_i32, %c0_i32_0 : i32, i32
  }
  func.func @transform_6(%arg0: i32) -> (i32, i32) {
    %c0_i32 = arith.constant 0 : i32
    %c0_i32_0 = arith.constant 0 : i32
    %c0_i32_1 = arith.constant 0 : i32
    return %c0_i32, %c0_i32_0 : i32, i32
  }
  func.func @transform_7(%arg0: i32) -> (i32, i32) {
    %c0_i32 = arith.constant 0 : i32
    %c0_i32_0 = arith.constant 0 : i32
    return %arg0, %c0_i32 : i32, i32
  }
}

</mosaic_0001>

<llo_original>
// kernel: tpu_custom_call.1
$region0: #{tpu_custom_call.1}
  #allocation0 [shape = 'u32[]', space=smem, size = 0x4, offset = 0x4, fixed_abs, tag = 'smem constant byte address 0x4 - core index']
  #allocation1 [shape = 'u32[72,128]{1,0:T(1,128)}', space=vmem, size = 0x9000, scoped, tag = 'internal scratch']
  %s0 = inlined_call_operand.hbm [shape: bf16[8,1024], index: 0, kind: input, shape index: {}]
  %s1 = inlined_call_operand.hbm [shape: bf16[1024,128], index: 1, kind: input, shape index: {}]
  %s2 = inlined_call_operand.vmem [shape: f32[1,128], index: 2, kind: input, shape index: {}]
  %s3 = inlined_call_operand.hbm [shape: bf16[128,128], index: 3, kind: input, shape index: {}]
  %s4 = inlined_call_operand.vmem [shape: f32[1,128], index: 4, kind: input, shape index: {}]
  %s5 = inlined_call_operand.hbm [shape: bf16[128,128], index: 5, kind: input, shape index: {}]
  %s6 = inlined_call_operand.vmem [shape: f32[1,128], index: 6, kind: input, shape index: {}]
  %s7 = inlined_call_operand.hbm [shape: f32[8,128], index: 7, kind: output, shape index: {}]
  %s8 = sld [smem:[#allocation0]]
  $region54: #{tpu_custom_call.1} parent=0
    _
  %s10 = ssub.s32 1, %s8
  %s11 = scalar_select 0, %s10, %s8
  $region1: #{tpu_custom_call.1} parent=0
    #allocation2 [shape = 'u8[16384]{0}', space=vmem, size = 0x4000, scoped, tag = 'input window, operand 0, single buffered']
    #allocation3 [shape = 's32[1]{0}', space=sflag, size = 0x4, scoped, tag = 'scoped memory for tpu_custom_call.1']
    #allocation4 [shape = 's32[1]{0}', space=sflag, size = 0x4, scoped, tag = 'scoped memory for tpu_custom_call.1']
    #allocation5 [shape = 'u8[262144]{0}', space=vmem, size = 0x40000, scoped, tag = 'input window, operand 1, single buffered']
    #allocation6 [shape = 's32[1]{0}', space=sflag, size = 0x4, scoped, tag = 'scoped memory for tpu_custom_call.1']
    #allocation7 [shape = 'u8[32768]{0}', space=vmem, size = 0x8000, scoped, tag = 'input window, operand 3, single buffered']
    #allocation8 [shape = 'u8[32768]{0}', space=vmem, size = 0x8000, scoped, tag = 'input window, operand 5, single buffered']
    #allocation9 [shape = 's32[1]{0}', space=sflag, size = 0x4, scoped, tag = 'scoped memory for tpu_custom_call.1']
    #allocation10 [shape = 'u8[4096]{0}', space=vmem, size = 0x1000, scoped, tag = 'output window, operand 0, single buffered']
    %12 = vsyncpa [#allocation3], 0
    %13 = vsyncpa [#allocation6], 0
    %14 = vsyncpa [#allocation9], 0
    %15 = vsyncpa [#allocation4], 0
    // Predicated region
    $region2: #{tpu_custom_call.1} parent=1 // pred_check
      _
    $region3: #{tpu_custom_call.1} parent=1 // pred_check_branch
      %17 = sbr.rel (0) target = $region5
    $region4: #{tpu_custom_call.1} parent=1 // pred_region
      %19 = vsyncadd [#allocation3], 0
      %s21 = sshll.u32 %s0, 4
      %s22 = int_to_ptr.hbm [resolvable:$true] %s21
      %s23 = sshll.u32 [#allocation2], 4
      %s24 = int_to_ptr.vmem [resolvable:$true] %s23
      %26 = dma.hbm_to_vmem [thread:$0]  %s22, 512, %s24, [#allocation3]
    $region5: #{tpu_custom_call.1} parent=1 // pred_fallthru
      _
    // Predicated region
    $region6: #{tpu_custom_call.1} parent=1 // pred_check
      _
    $region7: #{tpu_custom_call.1} parent=1 // pred_check_branch
      %28 = sbr.rel (0) target = $region9
    $region8: #{tpu_custom_call.1} parent=1 // pred_region
      %30 = vsyncadd [#allocation6], 0
      %s31 = sshll.u32 %s1, 4
      %s32 = int_to_ptr.hbm [resolvable:$true] %s31
      %s33 = sshll.u32 [#allocation5], 4
      %s34 = int_to_ptr.vmem [resolvable:$true] %s33
      %39 = dma.hbm_to_vmem [thread:$0]  %s32, 8192, %s34, [#allocation6], 64, 64, 4
    $region9: #{tpu_custom_call.1} parent=1 // pred_fallthru
      _
    // Predicated region
    $region10: #{tpu_custom_call.1} parent=1 // pred_check
      _
    $region11: #{tpu_custom_call.1} parent=1 // pred_check_branch
      %41 = sbr.rel (0) target = $region13
    $region12: #{tpu_custom_call.1} parent=1 // pred_region
      _
    $region13: #{tpu_custom_call.1} parent=1 // pred_fallthru
      _
    // Predicated region
    $region14: #{tpu_custom_call.1} parent=1 // pred_check
      _
    $region15: #{tpu_custom_call.1} parent=1 // pred_check_branch
      %43 = sbr.rel (0) target = $region17
    $region16: #{tpu_custom_call.1} parent=1 // pred_region
      %45 = vsyncadd [#allocation6], 0
      %s46 = sshll.u32 %s3, 4
      %s47 = int_to_ptr.hbm [resolvable:$true] %s46
      %s48 = sshll.u32 [#allocation7], 4
      %s49 = int_to_ptr.vmem [resolvable:$true] %s48
      %54 = dma.hbm_to_vmem [thread:$0]  %s47, 1024, %s49, [#allocation6], 64, 64, 4
    $region17: #{tpu_custom_call.1} parent=1 // pred_fallthru
      _
    // Predicated region
    $region18: #{tpu_custom_call.1} parent=1 // pred_check
      _
    $region19: #{tpu_custom_call.1} parent=1 // pred_check_branch
      %56 = sbr.rel (0) target = $region21
    $region20: #{tpu_custom_call.1} parent=1 // pred_region
      _
    $region21: #{tpu_custom_call.1} parent=1 // pred_fallthru
      _
    // Predicated region
    $region22: #{tpu_custom_call.1} parent=1 // pred_check
      _
    $region23: #{tpu_custom_call.1} parent=1 // pred_check_branch
      %58 = sbr.rel (0) target = $region25
    $region24: #{tpu_custom_call.1} parent=1 // pred_region
      %60 = vsyncadd [#allocation9], 0
      %s61 = sshll.u32 %s5, 4
      %s62 = int_to_ptr.hbm [resolvable:$true] %s61
      %s63 = sshll.u32 [#allocation8], 4
      %s64 = int_to_ptr.vmem [resolvable:$true] %s63
      %69 = dma.hbm_to_vmem [thread:$0]  %s62, 1024, %s64, [#allocation9], 64, 64, 4
    $region25: #{tpu_custom_call.1} parent=1 // pred_fallthru
      _
    // Predicated region
    $region26: #{tpu_custom_call.1} parent=1 // pred_check
      _
    $region27: #{tpu_custom_call.1} parent=1 // pred_check_branch
      %71 = sbr.rel (0) target = $region29
    $region28: #{tpu_custom_call.1} parent=1 // pred_region
      _
    $region29: #{tpu_custom_call.1} parent=1 // pred_fallthru
      _
    // Predicated region
    $region30: #{tpu_custom_call.1} parent=1 // pred_check
      _
    $region31: #{tpu_custom_call.1} parent=1 // pred_check_branch
      %73 = sbr.rel (0) target = $region33
    $region32: #{tpu_custom_call.1} parent=1 // pred_region
      %75 = dma.done [#allocation3], 512
    $region33: #{tpu_custom_call.1} parent=1 // pred_fallthru
      _
    // Predicated region
    $region34: #{tpu_custom_call.1} parent=1 // pred_check
      _
    $region35: #{tpu_custom_call.1} parent=1 // pred_check_branch
      %77 = sbr.rel (0) target = $region37
    $region36: #{tpu_custom_call.1} parent=1 // pred_region
      %79 = dma.done [#allocation6], 8192
    $region37: #{tpu_custom_call.1} parent=1 // pred_fallthru
      _
    // Predicated region
    $region38: #{tpu_custom_call.1} parent=1 // pred_check
      _
    $region39: #{tpu_custom_call.1} parent=1 // pred_check_branch
      %81 = sbr.rel (0) target = $region41
    $region40: #{tpu_custom_call.1} parent=1 // pred_region
      %83 = dma.done [#allocation6], 1024
    $region41: #{tpu_custom_call.1} parent=1 // pred_fallthru
      _
    // Predicated region
    $region42: #{tpu_custom_call.1} parent=1 // pred_check
      _
    $region43: #{tpu_custom_call.1} parent=1 // pred_check_branch
      %85 = sbr.rel (0) target = $region45
    $region44: #{tpu_custom_call.1} parent=1 // pred_region
      %87 = dma.done [#allocation9], 1024
    $region45: #{tpu_custom_call.1} parent=1 // pred_fallthru
      _
    %v88 = vld [vmem:[#allocation2] sm:$0xff]
    %v89 = vld [vmem:[#allocation2 + $0x8] sm:$0xff]
    %v90 = vld [vmem:[#allocation2 + $0x10] sm:$0xff]
    %v91 = vld [vmem:[#allocation2 + $0x18] sm:$0xff]
    %v92 = vld [vmem:[#allocation5] sm:$0xf]
    %v93 = vld [vmem:[#allocation5 + $0x4] sm:$0xf]
    %v94 = vld [vmem:[#allocation5 + $0x8] sm:$0xf]
    %v95 = vld [vmem:[#allocation5 + $0xc] sm:$0xf]
    %v96 = vld [vmem:[#allocation5 + $0x10] sm:$0xf]
    %v97 = vld [vmem:[#allocation5 + $0x14] sm:$0xf]
    %v98 = vld [vmem:[#allocation5 + $0x18] sm:$0xf]
    %v99 = vld [vmem:[#allocation5 + $0x1c] sm:$0xf]
    %v100 = vld [vmem:[#allocation5 + $0x20] sm:$0xf]
    %v101 = vld [vmem:[#allocation5 + $0x24] sm:$0xf]
    %v102 = vld [vmem:[#allocation5 + $0x28] sm:$0xf]
    %v103 = vld [vmem:[#allocation5 + $0x2c] sm:$0xf]
    %v104 = vld [vmem:[#allocation5 + $0x30] sm:$0xf]
    %v105 = vld [vmem:[#allocation5 + $0x34] sm:$0xf]
    %v106 = vld [vmem:[#allocation5 + $0x38] sm:$0xf]
    %v107 = vld [vmem:[#allocation5 + $0x3c] sm:$0xf]
    %v108 = vld [vmem:[#allocation5 + $0x40] sm:$0xf]
    %v109 = vld [vmem:[#allocation5 + $0x44] sm:$0xf]
    %v110 = vld [vmem:[#allocation5 + $0x48] sm:$0xf]
    %v111 = vld [vmem:[#allocation5 + $0x4c] sm:$0xf]
    %v112 = vld [vmem:[#allocation5 + $0x50] sm:$0xf]
    %v113 = vld [vmem:[#allocation5 + $0x54] sm:$0xf]
    %v114 = vld [vmem:[#allocation5 + $0x58] sm:$0xf]
    %v115 = vld [vmem:[#allocation5 + $0x5c] sm:$0xf]
    %v116 = vld [vmem:[#allocation5 + $0x60] sm:$0xf]
    %v117 = vld [vmem:[#allocation5 + $0x64] sm:$0xf]
    %v118 = vld [vmem:[#allocation5 + $0x68] sm:$0xf]
    %v119 = vld [vmem:[#allocation5 + $0x6c] sm:$0xf]
    %v120 = vld [vmem:[#allocation5 + $0x70] sm:$0xf]
    %v121 = vld [vmem:[#allocation5 + $0x74] sm:$0xf]
    %v122 = vld [vmem:[#allocation5 + $0x78] sm:$0xf]
    %v123 = vld [vmem:[#allocation5 + $0x7c] sm:$0xf]
    %v124 = vld [vmem:[#allocation5 + $0x80] sm:$0xf]
    %v125 = vld [vmem:[#allocation5 + $0x84] sm:$0xf]
    %v126 = vld [vmem:[#allocation5 + $0x88] sm:$0xf]
    %v127 = vld [vmem:[#allocation5 + $0x8c] sm:$0xf]
    %v128 = vld [vmem:[#allocation5 + $0x90] sm:$0xf]
    %v129 = vld [vmem:[#allocation5 + $0x94] sm:$0xf]
    %v130 = vld [vmem:[#allocation5 + $0x98] sm:$0xf]
    %v131 = vld [vmem:[#allocation5 + $0x9c] sm:$0xf]
    %v132 = vld [vmem:[#allocation5 + $0xa0] sm:$0xf]
    %v133 = vld [vmem:[#allocation5 + $0xa4] sm:$0xf]
    %v134 = vld [vmem:[#allocation5 + $0xa8] sm:$0xf]
    %v135 = vld [vmem:[#allocation5 + $0xac] sm:$0xf]
    %v136 = vld [vmem:[#allocation5 + $0xb0] sm:$0xf]
    %v137 = vld [vmem:[#allocation5 + $0xb4] sm:$0xf]
    %v138 = vld [vmem:[#allocation5 + $0xb8] sm:$0xf]
    %v139 = vld [vmem:[#allocation5 + $0xbc] sm:$0xf]
    %v140 = vld [vmem:[#allocation5 + $0xc0] sm:$0xf]
    %v141 = vld [vmem:[#allocation5 + $0xc4] sm:$0xf]
    %v142 = vld [vmem:[#allocation5 + $0xc8] sm:$0xf]
    %v143 = vld [vmem:[#allocation5 + $0xcc] sm:$0xf]
    %v144 = vld [vmem:[#allocation5 + $0xd0] sm:$0xf]
    %v145 = vld [vmem:[#allocation5 + $0xd4] sm:$0xf]
    %v146 = vld [vmem:[#allocation5 + $0xd8] sm:$0xf]
    %v147 = vld [vmem:[#allocation5 + $0xdc] sm:$0xf]
    %v148 = vld [vmem:[#allocation5 + $0xe0] sm:$0xf]
    %v149 = vld [vmem:[#allocation5 + $0xe4] sm:$0xf]
    %v150 = vld [vmem:[#allocation5 + $0xe8] sm:$0xf]
    %v151 = vld [vmem:[#allocation5 + $0xec] sm:$0xf]
    %v152 = vld [vmem:[#allocation5 + $0xf0] sm:$0xf]
    %v153 = vld [vmem:[#allocation5 + $0xf4] sm:$0xf]
    %v154 = vld [vmem:[#allocation5 + $0xf8] sm:$0xf]
    %v155 = vld [vmem:[#allocation5 + $0xfc] sm:$0xf]
    %v156 = vld [vmem:[#allocation5 + $0x100] sm:$0xf]
    %v157 = vld [vmem:[#allocation5 + $0x104] sm:$0xf]
    %v158 = vld [vmem:[#allocation5 + $0x108] sm:$0xf]
    %v159 = vld [vmem:[#allocation5 + $0x10c] sm:$0xf]
    %v160 = vld [vmem:[#allocation5 + $0x110] sm:$0xf]
    %v161 = vld [vmem:[#allocation5 + $0x114] sm:$0xf]
    %v162 = vld [vmem:[#allocation5 + $0x118] sm:$0xf]
    %v163 = vld [vmem:[#allocation5 + $0x11c] sm:$0xf]
    %v164 = vld [vmem:[#allocation5 + $0x120] sm:$0xf]
    %v165 = vld [vmem:[#allocation5 + $0x124] sm:$0xf]
    %v166 = vld [vmem:[#allocation5 + $0x128] sm:$0xf]
    %v167 = vld [vmem:[#allocation5 + $0x12c] sm:$0xf]
    %v168 = vld [vmem:[#allocation5 + $0x130] sm:$0xf]
    %v169 = vld [vmem:[#allocation5 + $0x134] sm:$0xf]
    %v170 = vld [vmem:[#allocation5 + $0x138] sm:$0xf]
    %v171 = vld [vmem:[#allocation5 + $0x13c] sm:$0xf]
    %v172 = vld [vmem:[#allocation5 + $0x140] sm:$0xf]
    %v173 = vld [vmem:[#allocation5 + $0x144] sm:$0xf]
    %v174 = vld [vmem:[#allocation5 + $0x148] sm:$0xf]
    %v175 = vld [vmem:[#allocation5 + $0x14c] sm:$0xf]
    %v176 = vld [vmem:[#allocation5 + $0x150] sm:$0xf]
    %v177 = vld [vmem:[#allocation5 + $0x154] sm:$0xf]
    %v178 = vld [vmem:[#allocation5 + $0x158] sm:$0xf]
    %v179 = vld [vmem:[#allocation5 + $0x15c] sm:$0xf]
    %v180 = vld [vmem:[#allocation5 + $0x160] sm:$0xf]
    %v181 = vld [vmem:[#allocation5 + $0x164] sm:$0xf]
    %v182 = vld [vmem:[#allocation5 + $0x168] sm:$0xf]
    %v183 = vld [vmem:[#allocation5 + $0x16c] sm:$0xf]
    %v184 = vld [vmem:[#allocation5 + $0x170] sm:$0xf]
    %v185 = vld [vmem:[#allocation5 + $0x174] sm:$0xf]
    %v186 = vld [vmem:[#allocation5 + $0x178] sm:$0xf]
    %v187 = vld [vmem:[#allocation5 + $0x17c] sm:$0xf]
    %v188 = vld [vmem:[#allocation5 + $0x180] sm:$0xf]
    %v189 = vld [vmem:[#allocation5 + $0x184] sm:$0xf]
    %v190 = vld [vmem:[#allocation5 + $0x188] sm:$0xf]
    %v191 = vld [vmem:[#allocation5 + $0x18c] sm:$0xf]
    %v192 = vld [vmem:[#allocation5 + $0x190] sm:$0xf]
    %v193 = vld [vmem:[#allocation5 + $0x194] sm:$0xf]
    %v194 = vld [vmem:[#allocation5 + $0x198] sm:$0xf]
    %v195 = vld [vmem:[#allocation5 + $0x19c] sm:$0xf]
    %v196 = vld [vmem:[#allocation5 + $0x1a0] sm:$0xf]
    %v197 = vld [vmem:[#allocation5 + $0x1a4] sm:$0xf]
    %v198 = vld [vmem:[#allocation5 + $0x1a8] sm:$0xf]
    %v199 = vld [vmem:[#allocation5 + $0x1ac] sm:$0xf]
    %v200 = vld [vmem:[#allocation5 + $0x1b0] sm:$0xf]
    %v201 = vld [vmem:[#allocation5 + $0x1b4] sm:$0xf]
    %v202 = vld [vmem:[#allocation5 + $0x1b8] sm:$0xf]
    %v203 = vld [vmem:[#allocation5 + $0x1bc] sm:$0xf]
    %v204 = vld [vmem:[#allocation5 + $0x1c0] sm:$0xf]
    %v205 = vld [vmem:[#allocation5 + $0x1c4] sm:$0xf]
    %v206 = vld [vmem:[#allocation5 + $0x1c8] sm:$0xf]
    %v207 = vld [vmem:[#allocation5 + $0x1cc] sm:$0xf]
    %v208 = vld [vmem:[#allocation5 + $0x1d0] sm:$0xf]
    %v209 = vld [vmem:[#allocation5 + $0x1d4] sm:$0xf]
    %v210 = vld [vmem:[#allocation5 + $0x1d8] sm:$0xf]
    %v211 = vld [vmem:[#allocation5 + $0x1dc] sm:$0xf]
    %v212 = vld [vmem:[#allocation5 + $0x1e0] sm:$0xf]
    %v213 = vld [vmem:[#allocation5 + $0x1e4] sm:$0xf]
    %v214 = vld [vmem:[#allocation5 + $0x1e8] sm:$0xf]
    %v215 = vld [vmem:[#allocation5 + $0x1ec] sm:$0xf]
    %v216 = vld [vmem:[#allocation5 + $0x1f0] sm:$0xf]
    %v217 = vld [vmem:[#allocation5 + $0x1f4] sm:$0xf]
    %v218 = vld [vmem:[#allocation5 + $0x1f8] sm:$0xf]
    %v219 = vld [vmem:[#allocation5 + $0x1fc] sm:$0xf]
    %v220 = vld [vmem:[%s2] sm:$0x1]
    %v222 = vperm.slane %v220, 0
    %v228 = vunpack.c.l.b16 %v88
    %v229 = vunpack.c.h.b16 %v88
    %v230 = vunpack.c.l.b16 %v89
    %v231 = vunpack.c.h.b16 %v89
    %v232 = vunpack.c.l.b16 %v90
    %v233 = vunpack.c.h.b16 %v90
    %v234 = vunpack.c.l.b16 %v91
    %v235 = vunpack.c.h.b16 %v91
    %v236 = vpack.c.b16 %v228, %v228
    %v237 = vpack.c.b16 %v229, %v229
    %v238 = vpack.c.b16 %v230, %v230
    %v239 = vpack.c.b16 %v231, %v231
    %v240 = vpack.c.b16 %v232, %v232
    %v241 = vpack.c.b16 %v233, %v233
    %v242 = vpack.c.b16 %v234, %v234
    %v243 = vpack.c.b16 %v235, %v235
    %v380 = vunpack.c.l.b16 %v92
    %v381 = vunpack.c.l.b16 %v93
    %v382 = vunpack.c.l.b16 %v94
    %v383 = vunpack.c.l.b16 %v95
    %v384 = vunpack.c.l.b16 %v96
    %v385 = vunpack.c.l.b16 %v97
    %v386 = vunpack.c.l.b16 %v98
    %v387 = vunpack.c.l.b16 %v99
    %v388 = vunpack.c.l.b16 %v100
    %v389 = vunpack.c.l.b16 %v101
    %v390 = vunpack.c.l.b16 %v102
    %v391 = vunpack.c.l.b16 %v103
    %v392 = vunpack.c.l.b16 %v104
    %v393 = vunpack.c.l.b16 %v105
    %v394 = vunpack.c.l.b16 %v106
    %v395 = vunpack.c.l.b16 %v107
    %v396 = vunpack.c.l.b16 %v108
    %v397 = vunpack.c.l.b16 %v109
    %v398 = vunpack.c.l.b16 %v110
    %v399 = vunpack.c.l.b16 %v111
    %v400 = vunpack.c.l.b16 %v112
    %v401 = vunpack.c.l.b16 %v113
    %v402 = vunpack.c.l.b16 %v114
    %v403 = vunpack.c.l.b16 %v115
    %v404 = vunpack.c.l.b16 %v116
    %v405 = vunpack.c.l.b16 %v117
    %v406 = vunpack.c.l.b16 %v118
    %v407 = vunpack.c.l.b16 %v119
    %v408 = vunpack.c.l.b16 %v120
    %v409 = vunpack.c.l.b16 %v121
    %v410 = vunpack.c.l.b16 %v122
    %v411 = vunpack.c.l.b16 %v123
    %v412 = vunpack.c.l.b16 %v124
    %v413 = vunpack.c.l.b16 %v125
    %v414 = vunpack.c.l.b16 %v126
    %v415 = vunpack.c.l.b16 %v127
    %v416 = vunpack.c.l.b16 %v128
    %v417 = vunpack.c.l.b16 %v129
    %v418 = vunpack.c.l.b16 %v130
    %v419 = vunpack.c.l.b16 %v131
    %v420 = vunpack.c.l.b16 %v132
    %v421 = vunpack.c.l.b16 %v133
    %v422 = vunpack.c.l.b16 %v134
    %v423 = vunpack.c.l.b16 %v135
    %v424 = vunpack.c.l.b16 %v136
    %v425 = vunpack.c.l.b16 %v137
    %v426 = vunpack.c.l.b16 %v138
    %v427 = vunpack.c.l.b16 %v139
    %v428 = vunpack.c.l.b16 %v140
    %v429 = vunpack.c.l.b16 %v141
    %v430 = vunpack.c.l.b16 %v142
    %v431 = vunpack.c.l.b16 %v143
    %v432 = vunpack.c.l.b16 %v144
    %v433 = vunpack.c.l.b16 %v145
    %v434 = vunpack.c.l.b16 %v146
    %v435 = vunpack.c.l.b16 %v147
    %v436 = vunpack.c.l.b16 %v148
    %v437 = vunpack.c.l.b16 %v149
    %v438 = vunpack.c.l.b16 %v150
    %v439 = vunpack.c.l.b16 %v151
    %v440 = vunpack.c.l.b16 %v152
    %v441 = vunpack.c.l.b16 %v153
    %v442 = vunpack.c.l.b16 %v154
    %v443 = vunpack.c.l.b16 %v155
    %v444 = vunpack.c.l.b16 %v156
    %v445 = vunpack.c.l.b16 %v157
    %v446 = vunpack.c.l.b16 %v158
    %v447 = vunpack.c.l.b16 %v159
    %v448 = vunpack.c.l.b16 %v160
    %v449 = vunpack.c.l.b16 %v161
    %v450 = vunpack.c.l.b16 %v162
    %v451 = vunpack.c.l.b16 %v163
    %v452 = vunpack.c.l.b16 %v164
    %v453 = vunpack.c.l.b16 %v165
    %v454 = vunpack.c.l.b16 %v166
    %v455 = vunpack.c.l.b16 %v167
    %v456 = vunpack.c.l.b16 %v168
    %v457 = vunpack.c.l.b16 %v169
    %v458 = vunpack.c.l.b16 %v170
    %v459 = vunpack.c.l.b16 %v171
    %v460 = vunpack.c.l.b16 %v172
    %v461 = vunpack.c.l.b16 %v173
    %v462 = vunpack.c.l.b16 %v174
    %v463 = vunpack.c.l.b16 %v175
    %v464 = vunpack.c.l.b16 %v176
    %v465 = vunpack.c.l.b16 %v177
    %v466 = vunpack.c.l.b16 %v178
    %v467 = vunpack.c.l.b16 %v179
    %v468 = vunpack.c.l.b16 %v180
    %v469 = vunpack.c.l.b16 %v181
    %v470 = vunpack.c.l.b16 %v182
    %v471 = vunpack.c.l.b16 %v183
    %v472 = vunpack.c.l.b16 %v184
    %v473 = vunpack.c.l.b16 %v185
    %v474 = vunpack.c.l.b16 %v186
    %v475 = vunpack.c.l.b16 %v187
    %v476 = vunpack.c.l.b16 %v188
    %v477 = vunpack.c.l.b16 %v189
    %v478 = vunpack.c.l.b16 %v190
    %v479 = vunpack.c.l.b16 %v191
    %v480 = vunpack.c.l.b16 %v192
    %v481 = vunpack.c.l.b16 %v193
    %v482 = vunpack.c.l.b16 %v194
    %v483 = vunpack.c.l.b16 %v195
    %v484 = vunpack.c.l.b16 %v196
    %v485 = vunpack.c.l.b16 %v197
    %v486 = vunpack.c.l.b16 %v198
    %v487 = vunpack.c.l.b16 %v199
    %v488 = vunpack.c.l.b16 %v200
    %v489 = vunpack.c.l.b16 %v201
    %v490 = vunpack.c.l.b16 %v202
    %v491 = vunpack.c.l.b16 %v203
    %v492 = vunpack.c.l.b16 %v204
    %v493 = vunpack.c.l.b16 %v205
    %v494 = vunpack.c.l.b16 %v206
    %v495 = vunpack.c.l.b16 %v207
    %v496 = vunpack.c.l.b16 %v208
    %v497 = vunpack.c.l.b16 %v209
    %v498 = vunpack.c.l.b16 %v210
    %v499 = vunpack.c.l.b16 %v211
    %v500 = vunpack.c.l.b16 %v212
    %v501 = vunpack.c.l.b16 %v213
    %v502 = vunpack.c.l.b16 %v214
    %v503 = vunpack.c.l.b16 %v215
    %v504 = vunpack.c.l.b16 %v216
    %v505 = vunpack.c.l.b16 %v217
    %v506 = vunpack.c.l.b16 %v218
    %v507 = vunpack.c.l.b16 %v219
    %v508 = vpack.c.b16 %v381, %v380
    %v509 = vpack.c.b16 %v383, %v382
    %v510 = vpack.c.b16 %v385, %v384
    %v511 = vpack.c.b16 %v387, %v386
    %v512 = vpack.c.b16 %v389, %v388
    %v513 = vpack.c.b16 %v391, %v390
    %v514 = vpack.c.b16 %v393, %v392
    %v515 = vpack.c.b16 %v395, %v394
    %v516 = vpack.c.b16 %v397, %v396
    %v517 = vpack.c.b16 %v399, %v398
    %v518 = vpack.c.b16 %v401, %v400
    %v519 = vpack.c.b16 %v403, %v402
    %v520 = vpack.c.b16 %v405, %v404
    %v521 = vpack.c.b16 %v407, %v406
    %v522 = vpack.c.b16 %v409, %v408
    %v523 = vpack.c.b16 %v411, %v410
    %v524 = vpack.c.b16 %v413, %v412
    %v525 = vpack.c.b16 %v415, %v414
    %v526 = vpack.c.b16 %v417, %v416
    %v527 = vpack.c.b16 %v419, %v418
    %v528 = vpack.c.b16 %v421, %v420
    %v529 = vpack.c.b16 %v423, %v422
    %v530 = vpack.c.b16 %v425, %v424
    %v531 = vpack.c.b16 %v427, %v426
    %v532 = vpack.c.b16 %v429, %v428
    %v533 = vpack.c.b16 %v431, %v430
    %v534 = vpack.c.b16 %v433, %v432
    %v535 = vpack.c.b16 %v435, %v434
    %v536 = vpack.c.b16 %v437, %v436
    %v537 = vpack.c.b16 %v439, %v438
    %v538 = vpack.c.b16 %v441, %v440
    %v539 = vpack.c.b16 %v443, %v442
    %v540 = vpack.c.b16 %v445, %v444
    %v541 = vpack.c.b16 %v447, %v446
    %v542 = vpack.c.b16 %v449, %v448
    %v543 = vpack.c.b16 %v451, %v450
    %v544 = vpack.c.b16 %v453, %v452
    %v545 = vpack.c.b16 %v455, %v454
    %v546 = vpack.c.b16 %v457, %v456
    %v547 = vpack.c.b16 %v459, %v458
    %v548 = vpack.c.b16 %v461, %v460
    %v549 = vpack.c.b16 %v463, %v462
    %v550 = vpack.c.b16 %v465, %v464
    %v551 = vpack.c.b16 %v467, %v466
    %v552 = vpack.c.b16 %v469, %v468
    %v553 = vpack.c.b16 %v471, %v470
    %v554 = vpack.c.b16 %v473, %v472
    %v555 = vpack.c.b16 %v475, %v474
    %v556 = vpack.c.b16 %v477, %v476
    %v557 = vpack.c.b16 %v479, %v478
    %v558 = vpack.c.b16 %v481, %v480
    %v559 = vpack.c.b16 %v483, %v482
    %v560 = vpack.c.b16 %v485, %v484
    %v561 = vpack.c.b16 %v487, %v486
    %v562 = vpack.c.b16 %v489, %v488
    %v563 = vpack.c.b16 %v491, %v490
    %v564 = vpack.c.b16 %v493, %v492
    %v565 = vpack.c.b16 %v495, %v494
    %v566 = vpack.c.b16 %v497, %v496
    %v567 = vpack.c.b16 %v499, %v498
    %v568 = vpack.c.b16 %v501, %v500
    %v569 = vpack.c.b16 %v503, %v502
    %v570 = vpack.c.b16 %v505, %v504
    %v571 = vpack.c.b16 %v507, %v506
    %636 = vmatpush.bf16.msra.mxu0 %v515
    %637 = vmatpush.bf16.msra.mxu0 %v514
    %638 = vmatpush.bf16.msra.mxu0 %v513
    %639 = vmatpush.bf16.msra.mxu0 %v512
    %640 = vmatpush.bf16.msra.mxu0 %v511
    %641 = vmatpush.bf16.msra.mxu0 %v510
    %642 = vmatpush.bf16.msra.mxu0 %v509
    %643 = vmatpush.bf16.msra.mxu0 %v508
    %644 = vmatmul.bf16.gmra.mxu0 %v236
    %v645 = vpop.f32.mrf.mxu0
    %v646 = vadd.f32 %v222, %v645
    %v647 = vpop.f32.mrf.mxu0
    %648 = vdwg.mxu0
    %649 = vmatpush.bf16.msra.mxu0 %v523
    %650 = vmatpush.bf16.msra.mxu0 %v522
    %651 = vmatpush.bf16.msra.mxu0 %v521
    %652 = vmatpush.bf16.msra.mxu0 %v520
    %653 = vmatpush.bf16.msra.mxu0 %v519
    %654 = vmatpush.bf16.msra.mxu0 %v518
    %655 = vmatpush.bf16.msra.mxu0 %v517
    %656 = vmatpush.bf16.msra.mxu0 %v516
    %657 = vmatmul.bf16.gmra.mxu0 %v237
    %v658 = vpop.f32.mrf.mxu0
    %v659 = vadd.f32 %v646, %v658
    %v660 = vpop.f32.mrf.mxu0
    %661 = vdwg.mxu0
    %662 = vmatpush.bf16.msra.mxu0 %v531
    %663 = vmatpush.bf16.msra.mxu0 %v530
    %664 = vmatpush.bf16.msra.mxu0 %v529
    %665 = vmatpush.bf16.msra.mxu0 %v528
    %666 = vmatpush.bf16.msra.mxu0 %v527
    %667 = vmatpush.bf16.msra.mxu0 %v526
    %668 = vmatpush.bf16.msra.mxu0 %v525
    %669 = vmatpush.bf16.msra.mxu0 %v524
    %670 = vmatmul.bf16.gmra.mxu0 %v238
    %v671 = vpop.f32.mrf.mxu0
    %v672 = vadd.f32 %v659, %v671
    %v673 = vpop.f32.mrf.mxu0
    %674 = vdwg.mxu0
    %675 = vmatpush.bf16.msra.mxu0 %v539
    %676 = vmatpush.bf16.msra.mxu0 %v538
    %677 = vmatpush.bf16.msra.mxu0 %v537
    %678 = vmatpush.bf16.msra.mxu0 %v536
    %679 = vmatpush.bf16.msra.mxu0 %v535
    %680 = vmatpush.bf16.msra.mxu0 %v534
    %681 = vmatpush.bf16.msra.mxu0 %v533
    %682 = vmatpush.bf16.msra.mxu0 %v532
    %683 = vmatmul.bf16.gmra.mxu0 %v239
    %v684 = vpop.f32.mrf.mxu0
    %v685 = vadd.f32 %v672, %v684
    %v686 = vpop.f32.mrf.mxu0
    %687 = vdwg.mxu0
    %688 = vmatpush.bf16.msra.mxu0 %v547
    %689 = vmatpush.bf16.msra.mxu0 %v546
    %690 = vmatpush.bf16.msra.mxu0 %v545
    %691 = vmatpush.bf16.msra.mxu0 %v544
    %692 = vmatpush.bf16.msra.mxu0 %v543
    %693 = vmatpush.bf16.msra.mxu0 %v542
    %694 = vmatpush.bf16.msra.mxu0 %v541
    %695 = vmatpush.bf16.msra.mxu0 %v540
    %696 = vmatmul.bf16.gmra.mxu0 %v240
    %v697 = vpop.f32.mrf.mxu0
    %v698 = vadd.f32 %v685, %v697
    %v699 = vpop.f32.mrf.mxu0
    %700 = vdwg.mxu0
    %701 = vmatpush.bf16.msra.mxu0 %v555
    %702 = vmatpush.bf16.msra.mxu0 %v554
    %703 = vmatpush.bf16.msra.mxu0 %v553
    %704 = vmatpush.bf16.msra.mxu0 %v552
    %705 = vmatpush.bf16.msra.mxu0 %v551
    %706 = vmatpush.bf16.msra.mxu0 %v550
    %707 = vmatpush.bf16.msra.mxu0 %v549
    %708 = vmatpush.bf16.msra.mxu0 %v548
    %709 = vmatmul.bf16.gmra.mxu0 %v241
    %v710 = vpop.f32.mrf.mxu0
    %v711 = vadd.f32 %v698, %v710
    %v712 = vpop.f32.mrf.mxu0
    %713 = vdwg.mxu0
    %714 = vmatpush.bf16.msra.mxu0 %v563
    %715 = vmatpush.bf16.msra.mxu0 %v562
    %716 = vmatpush.bf16.msra.mxu0 %v561
    %717 = vmatpush.bf16.msra.mxu0 %v560
    %718 = vmatpush.bf16.msra.mxu0 %v559
    %719 = vmatpush.bf16.msra.mxu0 %v558
    %720 = vmatpush.bf16.msra.mxu0 %v557
    %721 = vmatpush.bf16.msra.mxu0 %v556
    %722 = vmatmul.bf16.gmra.mxu0 %v242
    %v723 = vpop.f32.mrf.mxu0
    %v724 = vadd.f32 %v711, %v723
    %v725 = vpop.f32.mrf.mxu0
    %726 = vdwg.mxu0
    %727 = vmatpush.bf16.msra.mxu0 %v571
    %728 = vmatpush.bf16.msra.mxu0 %v570
    %729 = vmatpush.bf16.msra.mxu0 %v569
    %730 = vmatpush.bf16.msra.mxu0 %v568
    %731 = vmatpush.bf16.msra.mxu0 %v567
    %732 = vmatpush.bf16.msra.mxu0 %v566
    %733 = vmatpush.bf16.msra.mxu0 %v565
    %734 = vmatpush.bf16.msra.mxu0 %v564
    %735 = vmatmul.bf16.gmra.mxu0 %v243
    %v736 = vpop.f32.mrf.mxu0
    %v737 = vadd.f32 %v724, %v736
    %v738 = vpop.f32.mrf.mxu0
    %739 = vdwg.mxu0
    %v740 = vmax.f32 %v737, 0.0
    %v741 = vpack.c.bf16 %v740, %v740
    %v742 = vld [vmem:[#allocation7] sm:$0xf]
    %v743 = vld [vmem:[#allocation7 + $0x4] sm:$0xf]
    %v744 = vld [vmem:[#allocation7 + $0x8] sm:$0xf]
    %v745 = vld [vmem:[#allocation7 + $0xc] sm:$0xf]
    %v746 = vld [vmem:[#allocation7 + $0x10] sm:$0xf]
    %v747 = vld [vmem:[#allocation7 + $0x14] sm:$0xf]
    %v748 = vld [vmem:[#allocation7 + $0x18] sm:$0xf]
    %v749 = vld [vmem:[#allocation7 + $0x1c] sm:$0xf]
    %v750 = vld [vmem:[#allocation7 + $0x20] sm:$0xf]
    %v751 = vld [vmem:[#allocation7 + $0x24] sm:$0xf]
    %v752 = vld [vmem:[#allocation7 + $0x28] sm:$0xf]
    %v753 = vld [vmem:[#allocation7 + $0x2c] sm:$0xf]
    %v754 = vld [vmem:[#allocation7 + $0x30] sm:$0xf]
    %v755 = vld [vmem:[#allocation7 + $0x34] sm:$0xf]
    %v756 = vld [vmem:[#allocation7 + $0x38] sm:$0xf]
    %v757 = vld [vmem:[#allocation7 + $0x3c] sm:$0xf]
    %v758 = vld [vmem:[%s4] sm:$0x1]
    %v760 = vperm.slane %v758, 0
    %v778 = vunpack.c.l.b16 %v742
    %v779 = vunpack.c.l.b16 %v743
    %v780 = vunpack.c.l.b16 %v744
    %v781 = vunpack.c.l.b16 %v745
    %v782 = vunpack.c.l.b16 %v746
    %v783 = vunpack.c.l.b16 %v747
    %v784 = vunpack.c.l.b16 %v748
    %v785 = vunpack.c.l.b16 %v749
    %v786 = vunpack.c.l.b16 %v750
    %v787 = vunpack.c.l.b16 %v751
    %v788 = vunpack.c.l.b16 %v752
    %v789 = vunpack.c.l.b16 %v753
    %v790 = vunpack.c.l.b16 %v754
    %v791 = vunpack.c.l.b16 %v755
    %v792 = vunpack.c.l.b16 %v756
    %v793 = vunpack.c.l.b16 %v757
    %v794 = vpack.c.b16 %v779, %v778
    %v795 = vpack.c.b16 %v781, %v780
    %v796 = vpack.c.b16 %v783, %v782
    %v797 = vpack.c.b16 %v785, %v784
    %v798 = vpack.c.b16 %v787, %v786
    %v799 = vpack.c.b16 %v789, %v788
    %v800 = vpack.c.b16 %v791, %v790
    %v801 = vpack.c.b16 %v793, %v792
    %810 = vmatpush.bf16.msra.mxu0 %v801
    %811 = vmatpush.bf16.msra.mxu0 %v800
    %812 = vmatpush.bf16.msra.mxu0 %v799
    %813 = vmatpush.bf16.msra.mxu0 %v798
    %814 = vmatpush.bf16.msra.mxu0 %v797
    %815 = vmatpush.bf16.msra.mxu0 %v796
    %816 = vmatpush.bf16.msra.mxu0 %v795
    %817 = vmatpush.bf16.msra.mxu0 %v794
    %818 = vmatmul.bf16.gmra.mxu0 %v741
    %v819 = vpop.f32.mrf.mxu0
    %v820 = vadd.f32 %v760, %v819
    %v821 = vpop.f32.mrf.mxu0
    %822 = vdwg.mxu0
    %v823 = vmax.f32 %v820, 0.0
    %v824 = vpack.c.bf16 %v823, %v823
    %v825 = vld [vmem:[#allocation8] sm:$0xf]
    %v826 = vld [vmem:[#allocation8 + $0x4] sm:$0xf]
    %v827 = vld [vmem:[#allocation8 + $0x8] sm:$0xf]
    %v828 = vld [vmem:[#allocation8 + $0xc] sm:$0xf]
    %v829 = vld [vmem:[#allocation8 + $0x10] sm:$0xf]
    %v830 = vld [vmem:[#allocation8 + $0x14] sm:$0xf]
    %v831 = vld [vmem:[#allocation8 + $0x18] sm:$0xf]
    %v832 = vld [vmem:[#allocation8 + $0x1c] sm:$0xf]
    %v833 = vld [vmem:[#allocation8 + $0x20] sm:$0xf]
    %v834 = vld [vmem:[#allocation8 + $0x24] sm:$0xf]
    %v835 = vld [vmem:[#allocation8 + $0x28] sm:$0xf]
    %v836 = vld [vmem:[#allocation8 + $0x2c] sm:$0xf]
    %v837 = vld [vmem:[#allocation8 + $0x30] sm:$0xf]
    %v838 = vld [vmem:[#allocation8 + $0x34] sm:$0xf]
    %v839 = vld [vmem:[#allocation8 + $0x38] sm:$0xf]
    %v840 = vld [vmem:[#allocation8 + $0x3c] sm:$0xf]
    %v841 = vld [vmem:[%s6] sm:$0x1]
    %v843 = vperm.slane %v841, 0
    %v861 = vunpack.c.l.b16 %v825
    %v862 = vunpack.c.l.b16 %v826
    %v863 = vunpack.c.l.b16 %v827
    %v864 = vunpack.c.l.b16 %v828
    %v865 = vunpack.c.l.b16 %v829
    %v866 = vunpack.c.l.b16 %v830
    %v867 = vunpack.c.l.b16 %v831
    %v868 = vunpack.c.l.b16 %v832
    %v869 = vunpack.c.l.b16 %v833
    %v870 = vunpack.c.l.b16 %v834
    %v871 = vunpack.c.l.b16 %v835
    %v872 = vunpack.c.l.b16 %v836
    %v873 = vunpack.c.l.b16 %v837
    %v874 = vunpack.c.l.b16 %v838
    %v875 = vunpack.c.l.b16 %v839
    %v876 = vunpack.c.l.b16 %v840
    %v877 = vpack.c.b16 %v862, %v861
    %v878 = vpack.c.b16 %v864, %v863
    %v879 = vpack.c.b16 %v866, %v865
    %v880 = vpack.c.b16 %v868, %v867
    %v881 = vpack.c.b16 %v870, %v869
    %v882 = vpack.c.b16 %v872, %v871
    %v883 = vpack.c.b16 %v874, %v873
    %v884 = vpack.c.b16 %v876, %v875
    %893 = vmatpush.bf16.msra.mxu0 %v884
    %894 = vmatpush.bf16.msra.mxu0 %v883
    %895 = vmatpush.bf16.msra.mxu0 %v882
    %896 = vmatpush.bf16.msra.mxu0 %v881
    %897 = vmatpush.bf16.msra.mxu0 %v880
    %898 = vmatpush.bf16.msra.mxu0 %v879
    %899 = vmatpush.bf16.msra.mxu0 %v878
    %900 = vmatpush.bf16.msra.mxu0 %v877
    %901 = vmatmul.bf16.gmra.mxu0 %v824
    %v902 = vpop.f32.mrf.mxu0
    %v903 = vadd.f32 %v843, %v902
    %v904 = vpop.f32.mrf.mxu0
    %905 = vdwg.mxu0
    %906 = vst [vmem:[#allocation10] sm:$0xff] %v903
    // Predicated region
    $region46: #{tpu_custom_call.1} parent=1 // pred_check
      _
    $region47: #{tpu_custom_call.1} parent=1 // pred_check_branch
      %908 = sbr.rel (0) target = $region49
    $region48: #{tpu_custom_call.1} parent=1 // pred_region
      %910 = vsyncadd [#allocation4], 0
      %s912 = sshll.u32 [#allocation10], 4
      %s913 = int_to_ptr.vmem [resolvable:$true] %s912
      %s914 = sshll.u32 %s7, 4
      %s915 = int_to_ptr.hbm [resolvable:$true] %s914
      %917 = dma.vmem_to_hbm [thread:$0]  %s913, 128, %s915, [#allocation4]
    $region49: #{tpu_custom_call.1} parent=1 // pred_fallthru
      _
    // Predicated region
    $region50: #{tpu_custom_call.1} parent=1 // pred_check
      _
    $region51: #{tpu_custom_call.1} parent=1 // pred_check_branch
      %919 = sbr.rel (0) target = $region53
    $region52: #{tpu_custom_call.1} parent=1 // pred_region
      %921 = dma.done [#allocation4], 128
    $region53: #{tpu_custom_call.1} parent=1 // pred_fallthru
      _
    %922 = vsyncpa [#allocation3], 1
    %923 = vsyncpa [#allocation6], 1
    %924 = vsyncpa [#allocation9], 1
    %925 = vsyncpa [#allocation4], 1

</llo_original>
